<compile_context>
chip_gen: v7x
topology: tpu7x:2x2x1
jax: 0.10.0
libtpu: 0.0.40
codegen_flags: <defaults>
</compile_context>

<pallas_src>
import functools

import jax
import jax.numpy as jnp
from jax.experimental import pallas as pl
from jax.experimental.pallas import tpu as pltpu

STATE_DIM = 6      # env.high_level_state().shape[0] for Hw3Env
HIDDEN = 32
DROPOUT_P = 0.6


def _valuenet_body(xT_ref, w1_ref, b1_ref, w2_ref, b2_ref, out_ref, drop_ref=None):
    # fc1 + bias + ReLU:  (32, 6) @ (6, TB) -> (32, TB); batch is the lane dim.
    h = jnp.dot(w1_ref[...], xT_ref[...], preferred_element_type=jnp.float32)
    h = jnp.maximum(h + b1_ref[...], 0.0)
    # Dropout (train mode): pre-scaled keep multiplier, elementwise on the VPU.
    if drop_ref is not None:
        h = h * drop_ref[...]
    # fc2 as VPU multiply + sublane reduce (no N=1 MXU matmul); result (1, TB).
    out_ref[...] = jnp.sum(h * w2_ref[...], axis=0, keepdims=True) + b2_ref[...]


def _train_kernel(xT_ref, w1_ref, b1_ref, w2_ref, b2_ref, drop_ref, out_ref):
    _valuenet_body(xT_ref, w1_ref, b1_ref, w2_ref, b2_ref, out_ref, drop_ref)


def _eval_kernel(xT_ref, w1_ref, b1_ref, w2_ref, b2_ref, out_ref):
    _valuenet_body(xT_ref, w1_ref, b1_ref, w2_ref, b2_ref, out_ref, None)


def _dropout_multiplier(key, shape):
    """Pre-scaled inverted-dropout multiplier: keep/(1-p) with keep~Bernoulli(1-p)."""
    keep = jax.random.bernoulli(key, 1.0 - DROPOUT_P, shape)
    return keep.astype(jnp.float32) * (1.0 / (1.0 - DROPOUT_P))


@functools.partial(jax.jit, static_argnames=("training", "batch_tile"))
def valuenet_forward(x, params, dropout_key=None, *, training=True,
                     batch_tile=1024):
    """x: (B, STATE_DIM) float32 -> (B, 1) float32.

    Thread a fresh `dropout_key` per training step.
    """
    w1, b1, w2, b2 = params          # (32, 6), (32, 1), (32, 1), (1, 1)
    B = x.shape[0]
    xT = x.T                         # (STATE_DIM, B): batch becomes the lane dim

    inputs = [xT, w1, b1, w2, b2]
    if training:
        if dropout_key is None:
            dropout_key = jax.random.PRNGKey(0)
        inputs.append(_dropout_multiplier(dropout_key, (HIDDEN, B)))
        kernel = _train_kernel
    else:
        kernel = _eval_kernel

    out_shape = jax.ShapeDtypeStruct((1, B), jnp.float32)

    if B >= 2 * batch_tile and B % batch_tile == 0:
        # Large-batch path: tile the (lane) batch axis.  "parallel" shards the
        # grid across v7x's 2 TensorCores; on v5e/v6e it still gives pipelining.
        full = lambda i: (0, 0)
        tile = lambda i: (0, i)
        in_specs = [
            pl.BlockSpec((STATE_DIM, batch_tile), tile),
            pl.BlockSpec((HIDDEN, STATE_DIM), full),
            pl.BlockSpec((HIDDEN, 1), full),
            pl.BlockSpec((HIDDEN, 1), full),
            pl.BlockSpec((1, 1), full),
        ]
        if training:
            in_specs.append(pl.BlockSpec((HIDDEN, batch_tile), tile))
        out_1b = pl.pallas_call(
            kernel,
            out_shape=out_shape,
            grid=(B // batch_tile,),
            in_specs=in_specs,
            out_specs=pl.BlockSpec((1, batch_tile), tile),
            compiler_params=pltpu.CompilerParams(
                dimension_semantics=("parallel",)),
        )(*inputs)
    else:
        # Small-batch path: no grid, every operand is a single full VMEM block.
        vmem = pl.BlockSpec(memory_space=pltpu.MemorySpace.VMEM)
        out_1b = pl.pallas_call(
            kernel,
            out_shape=out_shape,
            in_specs=[vmem] * len(inputs),
            out_specs=vmem,
        )(*inputs)

    return out_1b.T                  # (B, 1), matching torch's output layout


def init_params(key):
    """torch.nn.Linear default init: U[-1/sqrt(fan_in), +1/sqrt(fan_in)]."""
    k1, k2, k3, k4 = jax.random.split(key, 4)
    bound1 = 1.0 / jnp.sqrt(jnp.float32(STATE_DIM))
    bound2 = 1.0 / jnp.sqrt(jnp.float32(HIDDEN))
    w1 = jax.random.uniform(k1, (HIDDEN, STATE_DIM), jnp.float32, -bound1, bound1)
    b1 = jax.random.uniform(k2, (HIDDEN, 1), jnp.float32, -bound1, bound1)
    w2 = jax.random.uniform(k3, (HIDDEN, 1), jnp.float32, -bound2, bound2)  # fc2.weight^T
    b2 = jax.random.uniform(k4, (1, 1), jnp.float32, -bound2, bound2)
    return w1, b1, w2, b2


if __name__ == "__main__":
    key = jax.random.PRNGKey(0)
    pkey, xkey, dkey = jax.random.split(key, 3)

    params = init_params(pkey)
    batch = 2
    x = jax.random.normal(xkey, (batch, STATE_DIM), jnp.float32)

    # Train-mode forward (dropout active, as in the PyTorch module's default mode).
    out_train = jax.block_until_ready(
        valuenet_forward(x, params, dkey, training=True))
    assert out_train.shape == (batch, 1)
    assert bool(jnp.all(jnp.isfinite(out_train)))

    # Eval-mode forward (no dropout).
    out_eval = jax.block_until_ready(
        valuenet_forward(x, params, training=False))
    assert out_eval.shape == (batch, 1)

    # Pure-JAX references (same dropout multiplier the wrapper generated).
    w1, b1, w2, b2 = params
    hp = jax.lax.Precision.HIGHEST
    pre = jnp.maximum(jnp.dot(x, w1.T, precision=hp) + b1.T, 0.0)     # (B, 32)
    drop = _dropout_multiplier(dkey, (HIDDEN, batch))                 # (32, B)
    ref_train = jnp.dot(pre * drop.T, w2, precision=hp) + b2
    ref_eval = jnp.dot(pre, w2, precision=hp) + b2

    assert jnp.allclose(out_train, ref_train, atol=1e-3, rtol=1e-3)
    assert jnp.allclose(out_eval, ref_eval, atol=1e-3, rtol=1e-3)

    print("KERNEL_OK")
</pallas_src>

<mosaic_0001>
module attributes {stable_mosaic.version = 11 : i64} {
  func.func @_train_kernel(%arg0: memref<6x2xf32, #tpu.memory_space<vmem>>, %arg1: memref<32x6xf32, #tpu.memory_space<vmem>>, %arg2: memref<32x1xf32, #tpu.memory_space<vmem>>, %arg3: memref<32x1xf32, #tpu.memory_space<vmem>>, %arg4: memref<1x1xf32, #tpu.memory_space<vmem>>, %arg5: memref<32x2xf32, #tpu.memory_space<vmem>>, %arg6: memref<1x2xf32, #tpu.memory_space<vmem>>) attributes {dimension_semantics = [], scalar_prefetch = 0 : i64, scratch_operands = 0 : i64, tpu.core_type = #tpu.core_type<tc>} {
    %c0 = arith.constant 0 : index
    %c0_0 = arith.constant 0 : index
    %0 = vector.load %arg1[%c0, %c0_0] : memref<32x6xf32, #tpu.memory_space<vmem>>, vector<32x6xf32>
    %c0_1 = arith.constant 0 : index
    %c0_2 = arith.constant 0 : index
    %1 = vector.load %arg0[%c0_1, %c0_2] : memref<6x2xf32, #tpu.memory_space<vmem>>, vector<6x2xf32>
    %cst = arith.constant dense<0.000000e+00> : vector<32x2xf32>
    %2 = tpu.matmul %0, %1, %cst {dimension_numbers = #tpu.dot_dimension_numbers<[1], [0], [0], [1], [0, 0, 1, 1], [], []>} : vector<32x6xf32>, vector<6x2xf32>, vector<32x2xf32> -> vector<32x2xf32>
    %c0_3 = arith.constant 0 : index
    %c0_4 = arith.constant 0 : index
    %3 = vector.load %arg2[%c0_3, %c0_4] : memref<32x1xf32, #tpu.memory_space<vmem>>, vector<32x1xf32>
    %4 = vector.broadcast %3 : vector<32x1xf32> to vector<32x2xf32>
    %5 = arith.addf %2, %4 : vector<32x2xf32>
    %cst_5 = arith.constant 0.000000e+00 : f32
    %6 = vector.broadcast %cst_5 : f32 to vector<32x2xf32>
    %7 = arith.maximumf %5, %6 : vector<32x2xf32>
    %c0_6 = arith.constant 0 : index
    %c0_7 = arith.constant 0 : index
    %8 = vector.load %arg5[%c0_6, %c0_7] : memref<32x2xf32, #tpu.memory_space<vmem>>, vector<32x2xf32>
    %9 = arith.mulf %7, %8 : vector<32x2xf32>
    %c0_8 = arith.constant 0 : index
    %c0_9 = arith.constant 0 : index
    %10 = vector.load %arg3[%c0_8, %c0_9] : memref<32x1xf32, #tpu.memory_space<vmem>>, vector<32x1xf32>
    %11 = vector.broadcast %10 : vector<32x1xf32> to vector<32x2xf32>
    %12 = arith.mulf %9, %11 : vector<32x2xf32>
    %cst_10 = arith.constant dense<0.000000e+00> : vector<2xf32>
    %13 = vector.multi_reduction <add>, %12, %cst_10 [0] : vector<32x2xf32> to vector<2xf32>
    %14 = vector.shape_cast %13 : vector<2xf32> to vector<1x2xf32>
    %c0_11 = arith.constant 0 : index
    %c0_12 = arith.constant 0 : index
    %15 = vector.load %arg4[%c0_11, %c0_12] : memref<1x1xf32, #tpu.memory_space<vmem>>, vector<1x1xf32>
    %16 = vector.broadcast %15 : vector<1x1xf32> to vector<1x2xf32>
    %17 = arith.addf %14, %16 : vector<1x2xf32>
    %c0_13 = arith.constant 0 : index
    %c0_14 = arith.constant 0 : index
    %18 = vector.load %arg6[%c0_13, %c0_14] : memref<1x2xf32, #tpu.memory_space<vmem>>, vector<1x2xf32>
    tpu.vector_store %arg6[%c0_13, %c0_14], %17 {strides = array<i32>} : memref<1x2xf32, #tpu.memory_space<vmem>>, vector<1x2xf32>,
    return
  }
}

</mosaic_0001>

<llo_original>
// kernel: valuenet_forward.1
$region0: #{valuenet_forward.1}
  #allocation0 [shape = 'u32[]', space=smem, size = 0x4, offset = 0x4, fixed_abs, tag = 'smem constant byte address 0x4 - core index']
  #allocation1 [shape = 'u32[144,128]{1,0:T(1,128)}', space=vmem, size = 0x12000, scoped, tag = 'internal scratch']
  #allocation2 [shape = 'f32[1,1]{1,0:T(1,128)S(1)}', space=vmem, size = 0x200, scoped, tag = 'scoped memory for valuenet_forward.1']
  %s0 = inlined_call_operand.vmem [shape: f32[6,2], index: 0, kind: input, shape index: {}]
  %s1 = inlined_call_operand.vmem [shape: f32[32,6], index: 1, kind: input, shape index: {}]
  %s2 = inlined_call_operand.vmem [shape: f32[32,1], index: 2, kind: input, shape index: {}]
  %s3 = inlined_call_operand.vmem [shape: f32[32,1], index: 3, kind: input, shape index: {}]
  %s4 = inlined_call_operand.<no memory space> [shape: f32[1,1], index: 4, kind: input, shape index: {}]
  %s5 = inlined_call_operand.vmem [shape: f32[32,2], index: 5, kind: input, shape index: {}]
  %s6 = inlined_call_operand.hbm [shape: f32[1,2], index: 6, kind: output, shape index: {}]
  %s7 = sld [smem:[#allocation0]]
  $region34: #{valuenet_forward.1} parent=0
    _
  %s9 = ssub.s32 1, %s7
  %s10 = scalar_select 0, %s9, %s7
  %v11 = vstv %s4
  %12 = vst [vmem:[#allocation2] sm:$0x1] %v11
  $region1: #{valuenet_forward.1} parent=0
    #allocation3 [shape = 'u8[512]{0}', space=vmem, size = 0x400, scoped, tag = 'output window, operand 0, single buffered']
    #allocation4 [shape = 's32[1]{0}', space=sflag, size = 0x4, scoped, tag = 'scoped memory for valuenet_forward.1']
    %13 = vsyncpa [#allocation4], 0
    // Predicated region
    $region2: #{valuenet_forward.1} parent=1 // pred_check
      _
    $region3: #{valuenet_forward.1} parent=1 // pred_check_branch
      %15 = sbr.rel (0) target = $region5
    $region4: #{valuenet_forward.1} parent=1 // pred_region
      _
    $region5: #{valuenet_forward.1} parent=1 // pred_fallthru
      _
    // Predicated region
    $region6: #{valuenet_forward.1} parent=1 // pred_check
      _
    $region7: #{valuenet_forward.1} parent=1 // pred_check_branch
      %17 = sbr.rel (0) target = $region9
    $region8: #{valuenet_forward.1} parent=1 // pred_region
      _
    $region9: #{valuenet_forward.1} parent=1 // pred_fallthru
      _
    // Predicated region
    $region10: #{valuenet_forward.1} parent=1 // pred_check
      _
    $region11: #{valuenet_forward.1} parent=1 // pred_check_branch
      %19 = sbr.rel (0) target = $region13
    $region12: #{valuenet_forward.1} parent=1 // pred_region
      _
    $region13: #{valuenet_forward.1} parent=1 // pred_fallthru
      _
    // Predicated region
    $region14: #{valuenet_forward.1} parent=1 // pred_check
      _
    $region15: #{valuenet_forward.1} parent=1 // pred_check_branch
      %21 = sbr.rel (0) target = $region17
    $region16: #{valuenet_forward.1} parent=1 // pred_region
      _
    $region17: #{valuenet_forward.1} parent=1 // pred_fallthru
      _
    // Predicated region
    $region18: #{valuenet_forward.1} parent=1 // pred_check
      _
    $region19: #{valuenet_forward.1} parent=1 // pred_check_branch
      %23 = sbr.rel (0) target = $region21
    $region20: #{valuenet_forward.1} parent=1 // pred_region
      _
    $region21: #{valuenet_forward.1} parent=1 // pred_fallthru
      _
    // Predicated region
    $region22: #{valuenet_forward.1} parent=1 // pred_check
      _
    $region23: #{valuenet_forward.1} parent=1 // pred_check_branch
      %25 = sbr.rel (0) target = $region25
    $region24: #{valuenet_forward.1} parent=1 // pred_region
      _
    $region25: #{valuenet_forward.1} parent=1 // pred_fallthru
      _
    %v26 = vld [vmem:[%s1] sm:$0xff]
    %v27 = vld [vmem:[%s1 + $0x8] sm:$0xff]
    %v28 = vld [vmem:[%s1 + $0x10] sm:$0xff]
    %v29 = vld [vmem:[%s1 + $0x18] sm:$0xff]
    %v30 = vld [vmem:[%s0] sm:$0x3f]
    %v31 = vld [vmem:[%s2] sm:$0xff]
    %v32 = vld [vmem:[%s2 + $0x8] sm:$0xff]
    %v33 = vld [vmem:[%s2 + $0x10] sm:$0xff]
    %v34 = vld [vmem:[%s2 + $0x18] sm:$0xff]
    %36 = vset.pattern.permute.xlu0 0
    %37 = vperm.xlu0 %36, %v31
    %v38 = vpop.permute.xlu0 %37
    %41 = vset.pattern.permute.xlu0 0
    %42 = vperm.xlu0 %41, %v32
    %v43 = vpop.permute.xlu0 %42
    %46 = vset.pattern.permute.xlu0 0
    %47 = vperm.xlu0 %46, %v33
    %v48 = vpop.permute.xlu0 %47
    %51 = vset.pattern.permute.xlu0 0
    %52 = vperm.xlu0 %51, %v34
    %v53 = vpop.permute.xlu0 %52
    %vm55 = vcmask 48128
    %v57 = vsel %vm55, %v26, 0
    %v60 = vsel %vm55, %v27, 0
    %v63 = vsel %vm55, %v28, 0
    %v66 = vsel %vm55, %v29, 0
    %vm68 = vcmask 1045504
    %v70 = vsel %vm68, %v30, 0
    %72 = vmatprep.subr.mxu0 0.0
    %73 = vmatpush1.msra.mxu0 %v70
    %74 = vmatprep.subr.mxu0 0.0
    %75 = vmatpush1.msra.mxu0 0.0
    %76 = vmatprep.subr.mxu0 0.0
    %77 = vmatpush1.msra.mxu0 0.0
    %78 = vmatprep.subr.mxu0 0.0
    %79 = vmatpush1.msra.mxu0 0.0
    %80 = vmatprep.subr.mxu0 0.0
    %81 = vmatpush1.msra.mxu0 0.0
    %82 = vmatprep.subr.mxu0 0.0
    %83 = vmatpush1.msra.mxu0 0.0
    %84 = vmatprep.subr.mxu0 0.0
    %85 = vmatpush1.msra.mxu0 0.0
    %86 = vmatprep.subr.mxu0 0.0
    %87 = vmatpush1.msra.mxu0 0.0
    %88 = vmatprep.subr.mxu0 0.0
    %89 = vmatpush1.msra.mxu0 0.0
    %90 = vmatprep.subr.mxu0 0.0
    %91 = vmatpush1.msra.mxu0 0.0
    %92 = vmatprep.subr.mxu0 0.0
    %93 = vmatpush1.msra.mxu0 0.0
    %94 = vmatprep.subr.mxu0 0.0
    %95 = vmatpush1.msra.mxu0 0.0
    %96 = vmatprep.subr.mxu0 0.0
    %97 = vmatpush1.msra.mxu0 0.0
    %98 = vmatprep.subr.mxu0 0.0
    %99 = vmatpush1.msra.mxu0 0.0
    %100 = vmatprep.subr.mxu0 0.0
    %101 = vmatpush1.msra.mxu0 0.0
    %102 = vmatprep.subr.mxu0 0.0
    %103 = vmatpush1.msra.mxu0 0.0
    %104 = vmatprep.subr.mxu0 0.0
    %105 = vmatpush1.msra.mxu0 0.0
    %106 = vmatprep.subr.mxu0 0.0
    %107 = vmatpush1.msra.mxu0 0.0
    %108 = vmatprep.subr.mxu0 0.0
    %109 = vmatpush1.msra.mxu0 0.0
    %110 = vmatprep.subr.mxu0 0.0
    %111 = vmatpush1.msra.mxu0 0.0
    %112 = vmatprep.subr.mxu0 0.0
    %113 = vmatpush1.msra.mxu0 0.0
    %114 = vmatprep.subr.mxu0 0.0
    %115 = vmatpush1.msra.mxu0 0.0
    %116 = vmatprep.subr.mxu0 0.0
    %117 = vmatpush1.msra.mxu0 0.0
    %118 = vmatprep.subr.mxu0 0.0
    %119 = vmatpush1.msra.mxu0 0.0
    %120 = vmatprep.subr.mxu0 0.0
    %121 = vmatpush1.msra.mxu0 0.0
    %122 = vmatprep.subr.mxu0 0.0
    %123 = vmatpush1.msra.mxu0 0.0
    %124 = vmatprep.subr.mxu0 0.0
    %125 = vmatpush1.msra.mxu0 0.0
    %126 = vmatprep.subr.mxu0 0.0
    %127 = vmatpush1.msra.mxu0 0.0
    %128 = vmatprep.subr.mxu0 0.0
    %129 = vmatpush1.msra.mxu0 0.0
    %130 = vmatprep.subr.mxu0 0.0
    %131 = vmatpush1.msra.mxu0 0.0
    %132 = vmatprep.subr.mxu0 0.0
    %133 = vmatpush1.msra.mxu0 0.0
    %134 = vmatprep.subr.mxu0 0.0
    %135 = vmatpush1.msra.mxu0 0.0
    %136 = vmatprep.mubr.f32.mxu0 0.0
    %137 = vmatmul.mubr.f32.gmra.mrb[0].mxu0 %v57
    %v138 = vpop.f32.mrb[0].mxu0
    %v139 = vadd.f32 %v38, %v138
    %v140 = vpop.f32.mrb[0].mxu0
    %141 = vmatprep.mubr.f32.mxu0 0.0
    %142 = vmatmul.mubr.f32.gmra.mrb[0].mxu0 %v60
    %v143 = vpop.f32.mrb[0].mxu0
    %v144 = vadd.f32 %v43, %v143
    %v145 = vpop.f32.mrb[0].mxu0
    %146 = vmatprep.mubr.f32.mxu0 0.0
    %147 = vmatmul.mubr.f32.gmra.mrb[0].mxu0 %v63
    %v148 = vpop.f32.mrb[0].mxu0
    %v149 = vadd.f32 %v48, %v148
    %v150 = vpop.f32.mrb[0].mxu0
    %151 = vmatprep.mubr.f32.mxu0 0.0
    %152 = vmatmul.mubr.f32.gmra.mrb[0].mxu0 %v66
    %v153 = vpop.f32.mrb[0].mxu0
    %v154 = vadd.f32 %v53, %v153
    %v155 = vpop.f32.mrb[0].mxu0
    %156 = vdwg.mxu0
    %v157 = vmax.f32 %v139, 0.0
    %v158 = vmax.f32 %v144, 0.0
    %v159 = vmax.f32 %v149, 0.0
    %v160 = vmax.f32 %v154, 0.0
    %v161 = vld [vmem:[%s5] sm:$0xff]
    %v162 = vld [vmem:[%s5 + $0x8] sm:$0xff]
    %v163 = vld [vmem:[%s5 + $0x10] sm:$0xff]
    %v164 = vld [vmem:[%s5 + $0x18] sm:$0xff]
    %v165 = vmul.f32 %v157, %v161
    %v166 = vmul.f32 %v158, %v162
    %v167 = vmul.f32 %v159, %v163
    %v168 = vmul.f32 %v160, %v164
    %v169 = vld [vmem:[%s3] sm:$0xff]
    %v170 = vld [vmem:[%s3 + $0x8] sm:$0xff]
    %v171 = vld [vmem:[%s3 + $0x10] sm:$0xff]
    %v172 = vld [vmem:[%s3 + $0x18] sm:$0xff]
    %174 = vset.pattern.permute.xlu0 0
    %175 = vperm.xlu0 %174, %v169
    %v176 = vpop.permute.xlu0 %175
    %179 = vset.pattern.permute.xlu0 0
    %180 = vperm.xlu0 %179, %v170
    %v181 = vpop.permute.xlu0 %180
    %184 = vset.pattern.permute.xlu0 0
    %185 = vperm.xlu0 %184, %v171
    %v186 = vpop.permute.xlu0 %185
    %189 = vset.pattern.permute.xlu0 0
    %190 = vperm.xlu0 %189, %v172
    %v191 = vpop.permute.xlu0 %190
    %v193 = vmul.f32 %v165, %v176
    %v194 = vmul.f32 %v166, %v181
    %v195 = vmul.f32 %v167, %v186
    %v196 = vmul.f32 %v168, %v191
    %vm197 = vcmask 15360
    %v198 = vsel %vm197, %v193, 0.0
    %v199 = vsel %vm197, %v194, 0.0
    %v200 = vadd.f32 %v198, %v199
    %v201 = vsel %vm197, %v195, 0.0
    %v202 = vadd.f32 %v200, %v201
    %v203 = vsel %vm197, %v196, 0.0
    %v204 = vadd.f32 %v202, %v203
    %v205 = vrot.slane %v204, 4
    %v206 = vadd.f32 %v204, %v205
    %v207 = vrot.slane %v206, 2
    %v208 = vadd.f32 %v206, %v207
    %v209 = vrot.slane %v208, 1
    %v210 = vadd.f32 %v208, %v209
    %v211 = vld [vmem:[#allocation2] sm:$0x1]
    %213 = vset.pattern.permute.xlu0 0
    %214 = vperm.xlu0 %213, %v211
    %v215 = vpop.permute.xlu0 %214
    %v217 = vlaneseq
    %v218 = vshrl.u32 %v217, 7
    %v219 = vsub.s32 0, %v218
    %v220 = vrot.slane %v215, %v219
    %v221 = vadd.f32 %v210, %v220
    %vm222 = vcmask 8192
    %223 = vst.msk [vmem:[#allocation3] sm:$0x1] %vm222, %v221
    // Predicated region
    $region26: #{valuenet_forward.1} parent=1 // pred_check
      _
    $region27: #{valuenet_forward.1} parent=1 // pred_check_branch
      %225 = sbr.rel (0) target = $region29
    $region28: #{valuenet_forward.1} parent=1 // pred_region
      %s227 = ssub.s32 16, 16
      %228 = vsyncadd [#allocation4], %s227
      %s230 = sshll.u32 [#allocation3], 4
      %s231 = int_to_ptr.vmem [resolvable:$true] %s230
      %233 = dma.vmem_to_hbm [thread:$0]  %s231, 16, %s6, [#allocation4]
    $region29: #{valuenet_forward.1} parent=1 // pred_fallthru
      _
    // Predicated region
    $region30: #{valuenet_forward.1} parent=1 // pred_check
      _
    $region31: #{valuenet_forward.1} parent=1 // pred_check_branch
      %235 = sbr.rel (0) target = $region33
    $region32: #{valuenet_forward.1} parent=1 // pred_region
      %236 = dma.done [#allocation4], 16
    $region33: #{valuenet_forward.1} parent=1 // pred_fallthru
      _
    %237 = vsyncpa [#allocation4], 1

</llo_original>
